<compile_context>
chip_gen: v7x
topology: tpu7x:2x2x1
jax: 0.10.0
libtpu: 0.0.40
codegen_flags: <defaults>
</compile_context>

<pallas_src>
import functools

import jax
import jax.numpy as jnp
from jax.experimental import pallas as pl
from jax.experimental.pallas import tpu as pltpu

IN_DIM = 13
HID_DIM = 32
OUT_DIM = 1

PACK = 8                    # samples packed per 128-lane row
PACKED_IN = PACK * 16       # 128  (16 feature slots per sample: 13 + 1(bias) + 2 pad)
PACKED_HID = PACK * HID_DIM  # 256
GRAIN = 1024                # tile_b granularity -> 128 packed sublanes per block


def _round_up(x: int, m: int) -> int:
    return ((x + m - 1) // m) * m


def _cdiv(a: int, b: int) -> int:
    return (a + b - 1) // b


def _mlp_kernel(z_ref, w1_ref, w2_ref, b2_ref, o_ref):
    # Layer 1 on the MXU: (tile/8, 128) @ (128, 256), f32 accumulate.
    # The layer-1 bias is already folded in via the constant-1 feature slot.
    h = jnp.dot(z_ref[...], w1_ref[...], preferred_element_type=jnp.float32)
    # ReLU on the VPU (f32), then cast to the compute dtype for layer 2.
    h = jnp.maximum(h, 0.0).astype(w2_ref.dtype)
    # Layer 2: block-diagonal (256, 8) projection -> 8 outputs per packed row.
    out = jnp.dot(h, w2_ref[...], preferred_element_type=jnp.float32)
    o_ref[...] = (out + b2_ref[...]).astype(o_ref.dtype)


@functools.partial(jax.jit, static_argnames=("tile_b", "compute_dtype"))
def latent_predictor_x14(z, w1, b1, w2, b2, *, tile_b=16384,
                         compute_dtype=jnp.float32):
    """Forward pass of LatentPredictor_x14.

    z:  (B, 13) float32
    w1: (13, 32), b1: (32,)
    w2: (32, 1),  b2: (1,)
    returns (B, 1) float32
    """
    B = z.shape[0]

    # ---- choose tiling --------------------------------------------------
    b_grain = _round_up(max(B, 1), GRAIN)
    tb = max(GRAIN, _round_up(min(tile_b, b_grain), GRAIN))
    n_tiles = _cdiv(b_grain, tb)
    if n_tiles == 1 and b_grain >= 2 * GRAIN:
        # Guarantee >= 2 grid steps so "parallel" can split across v7x's 2 TCs.
        tb = _round_up(_cdiv(b_grain, 2), GRAIN)
        n_tiles = _cdiv(b_grain, tb)
    b_pad = n_tiles * tb

    cd = compute_dtype

    # ---- pack inputs: 8 samples per 128-lane row ------------------------
    # Feature dim 13 -> 16: [z(13), 1.0 (bias slot), 0, 0].  The batch pad is
    # fused into this same copy (no separate full jnp.pad over z).
    zc = z.astype(cd)
    z_aug = jnp.concatenate(
        [zc, jnp.ones((B, 1), cd), jnp.zeros((B, 2), cd)], axis=1)  # (B, 16)
    if b_pad != B:
        z_aug = jnp.pad(z_aug, ((0, b_pad - B), (0, 0)))
    z_packed = z_aug.reshape(b_pad // PACK, PACKED_IN)               # (B/8, 128)

    # ---- block-diagonal resident weights (tiny; built per call) ---------
    w1p = jnp.zeros((16, HID_DIM), jnp.float32).at[:IN_DIM, :].set(w1)
    w1p = w1p.at[IN_DIM, :].set(b1)     # bias row, hit by the constant-1 slot
    w1_block = jax.scipy.linalg.block_diag(*([w1p] * PACK)).astype(cd)  # (128, 256)
    w2_block = jax.scipy.linalg.block_diag(*([w2.astype(jnp.float32)] * PACK)
                                           ).astype(cd)                 # (256, 8)
    b2_2d = b2.reshape(1, 1).astype(jnp.float32)

    rows = b_pad // PACK
    trows = tb // PACK

    out = pl.pallas_call(
        _mlp_kernel,
        out_shape=jax.ShapeDtypeStruct((rows, PACK), jnp.float32),
        grid=(n_tiles,),
        in_specs=[
            pl.BlockSpec((trows, PACKED_IN), lambda i: (i, 0)),      # packed z tile
            pl.BlockSpec((PACKED_IN, PACKED_HID), lambda i: (0, 0)),  # W1 block-diag (resident)
            pl.BlockSpec((PACKED_HID, PACK), lambda i: (0, 0)),       # W2 block-diag (resident)
            pl.BlockSpec((1, 1), lambda i: (0, 0)),                   # b2 (resident)
        ],
        out_specs=pl.BlockSpec((trows, PACK), lambda i: (i, 0)),
        compiler_params=pltpu.CompilerParams(
            dimension_semantics=("parallel",),
            vmem_limit_bytes=32 * 1024 * 1024),
    )(z_packed, w1_block, w2_block, b2_2d)

    # (B_pad/8, 8) row-major == sample order; -> (B, 1).
    return out.reshape(b_pad, OUT_DIM)[:B]


def init_params(key):
    """Deterministic init mirroring nn.Linear default (U(-1/sqrt(fan_in), +))."""
    k1, k2, k3, k4 = jax.random.split(key, 4)
    bound1 = 1.0 / jnp.sqrt(float(IN_DIM))
    bound2 = 1.0 / jnp.sqrt(float(HID_DIM))
    w1 = jax.random.uniform(k1, (IN_DIM, HID_DIM), jnp.float32, -bound1, bound1)
    b1 = jax.random.uniform(k2, (HID_DIM,), jnp.float32, -bound1, bound1)
    w2 = jax.random.uniform(k3, (HID_DIM, OUT_DIM), jnp.float32, -bound2, bound2)
    b2 = jax.random.uniform(k4, (OUT_DIM,), jnp.float32, -bound2, bound2)
    return w1, b1, w2, b2


if __name__ == "__main__":
    key = jax.random.PRNGKey(0)
    k_z, k_p = jax.random.split(key)
    w1, b1, w2, b2 = init_params(k_p)

    def ref_fn(zz):
        return jnp.maximum(zz @ w1 + b1, 0.0) @ w2 + b2

    # Small shape consistent with the module.
    batch = 8
    z = jax.random.normal(k_z, (batch, IN_DIM), jnp.float32)
    out = jax.block_until_ready(latent_predictor_x14(z, w1, b1, w2, b2))
    assert out.shape == (batch, OUT_DIM)
    assert jnp.allclose(out, ref_fn(z), atol=1e-4, rtol=1e-4)

    # Ragged batch + automatic 2-way tile split (>= 2 grid steps).
    batch2 = 2500
    z2 = jax.random.normal(k_z, (batch2, IN_DIM), jnp.float32)
    out2 = jax.block_until_ready(latent_predictor_x14(z2, w1, b1, w2, b2))
    assert out2.shape == (batch2, OUT_DIM)
    assert jnp.allclose(out2, ref_fn(z2), atol=1e-4, rtol=1e-4)

    # Explicit small tile (3 grid steps) exercises the pipelined grid path.
    out3 = jax.block_until_ready(
        latent_predictor_x14(z2, w1, b1, w2, b2, tile_b=1024))
    assert jnp.allclose(out3, ref_fn(z2), atol=1e-4, rtol=1e-4)

    # bf16 fast path (f32 accumulation); looser tolerance.
    out_bf = jax.block_until_ready(
        latent_predictor_x14(z2, w1, b1, w2, b2, compute_dtype=jnp.bfloat16))
    assert jnp.allclose(out_bf, ref_fn(z2), atol=5e-2, rtol=5e-2)

    print("KERNEL_OK")
</pallas_src>

<mosaic_0001>
module attributes {stable_mosaic.version = 11 : i64} {
  func.func @_mlp_kernel(%arg0: i32, %arg1: memref<128x128xf32, #tpu.memory_space<vmem>>, %arg2: memref<128x256xf32, #tpu.memory_space<vmem>>, %arg3: memref<256x8xf32, #tpu.memory_space<vmem>>, %arg4: memref<1x1xf32, #tpu.memory_space<vmem>>, %arg5: memref<128x8xf32, #tpu.memory_space<vmem>>) attributes {dimension_semantics = [#tpu.dimension_semantics<parallel>], iteration_bounds = array<i64: 1>, scalar_prefetch = 0 : i64, scratch_operands = 0 : i64, tpu.core_type = #tpu.core_type<tc>, window_params = [{transform_indices = @transform_0, window_bounds = array<i64: 128, 128>}, {pipeline_mode = #tpu.pipeline_mode<synchronous>, transform_indices = @transform_1, window_bounds = array<i64: 128, 256>}, {pipeline_mode = #tpu.pipeline_mode<synchronous>, transform_indices = @transform_2, window_bounds = array<i64: 256, 8>}, {pipeline_mode = #tpu.pipeline_mode<synchronous>, transform_indices = @transform_3, window_bounds = array<i64: 1, 1>}, {transform_indices = @transform_4, window_bounds = array<i64: 128, 8>}]} {
    %c0 = arith.constant 0 : index
    %c0_0 = arith.constant 0 : index
    %0 = vector.load %arg1[%c0, %c0_0] : memref<128x128xf32, #tpu.memory_space<vmem>>, vector<128x128xf32>
    %c0_1 = arith.constant 0 : index
    %c0_2 = arith.constant 0 : index
    %1 = vector.load %arg2[%c0_1, %c0_2] : memref<128x256xf32, #tpu.memory_space<vmem>>, vector<128x256xf32>
    %cst = arith.constant dense<0.000000e+00> : vector<128x256xf32>
    %2 = tpu.matmul %0, %1, %cst {dimension_numbers = #tpu.dot_dimension_numbers<[1], [0], [0], [1], [0, 0, 1, 1], [], []>} : vector<128x128xf32>, vector<128x256xf32>, vector<128x256xf32> -> vector<128x256xf32>
    %cst_3 = arith.constant 0.000000e+00 : f32
    %3 = vector.broadcast %cst_3 : f32 to vector<128x256xf32>
    %4 = arith.maximumf %2, %3 : vector<128x256xf32>
    %c0_4 = arith.constant 0 : index
    %c0_5 = arith.constant 0 : index
    %5 = vector.load %arg3[%c0_4, %c0_5] : memref<256x8xf32, #tpu.memory_space<vmem>>, vector<256x8xf32>
    %cst_6 = arith.constant dense<0.000000e+00> : vector<128x8xf32>
    %6 = tpu.matmul %4, %5, %cst_6 {dimension_numbers = #tpu.dot_dimension_numbers<[1], [0], [0], [1], [0, 0, 1, 1], [], []>} : vector<128x256xf32>, vector<256x8xf32>, vector<128x8xf32> -> vector<128x8xf32>
    %c0_7 = arith.constant 0 : index
    %c0_8 = arith.constant 0 : index
    %7 = vector.load %arg4[%c0_7, %c0_8] : memref<1x1xf32, #tpu.memory_space<vmem>>, vector<1x1xf32>
    %8 = vector.broadcast %7 : vector<1x1xf32> to vector<128x8xf32>
    %9 = arith.addf %6, %8 : vector<128x8xf32>
    %c0_9 = arith.constant 0 : index
    %c0_10 = arith.constant 0 : index
    %10 = vector.load %arg5[%c0_9, %c0_10] : memref<128x8xf32, #tpu.memory_space<vmem>>, vector<128x8xf32>
    tpu.vector_store %arg5[%c0_9, %c0_10], %9 {strides = array<i32>} : memref<128x8xf32, #tpu.memory_space<vmem>>, vector<128x8xf32>,
    return
  }
  func.func @transform_0(%arg0: i32) -> (i32, i32) {
    %c0_i32 = arith.constant 0 : i32
    %c0_i32_0 = arith.constant 0 : i32
    return %arg0, %c0_i32 : i32, i32
  }
  func.func @transform_1(%arg0: i32) -> (i32, i32) {
    %c0_i32 = arith.constant 0 : i32
    %c0_i32_0 = arith.constant 0 : i32
    %c0_i32_1 = arith.constant 0 : i32
    return %c0_i32, %c0_i32_0 : i32, i32
  }
  func.func @transform_2(%arg0: i32) -> (i32, i32) {
    %c0_i32 = arith.constant 0 : i32
    %c0_i32_0 = arith.constant 0 : i32
    %c0_i32_1 = arith.constant 0 : i32
    return %c0_i32, %c0_i32_0 : i32, i32
  }
  func.func @transform_3(%arg0: i32) -> (i32, i32) {
    %c0_i32 = arith.constant 0 : i32
    %c0_i32_0 = arith.constant 0 : i32
    %c0_i32_1 = arith.constant 0 : i32
    return %c0_i32, %c0_i32_0 : i32, i32
  }
  func.func @transform_4(%arg0: i32) -> (i32, i32) {
    %c0_i32 = arith.constant 0 : i32
    %c0_i32_0 = arith.constant 0 : i32
    return %arg0, %c0_i32 : i32, i32
  }
}

</mosaic_0001>

<llo_original>
// kernel: latent_predictor_x14.1
$region0: #{latent_predictor_x14.1}
  #allocation0 [shape = 'u32[]', space=smem, size = 0x4, offset = 0x4, fixed_abs, tag = 'smem constant byte address 0x4 - core index']
  #allocation1 [shape = 'u32[144,128]{1,0:T(1,128)}', space=vmem, size = 0x12000, scoped, tag = 'internal scratch']
  #allocation2 [shape = 'f32[1,1]{1,0:T(1,128)S(1)}', space=vmem, size = 0x200, scoped, tag = 'scoped memory for latent_predictor_x14.1']
  %s0 = inlined_call_operand.vmem [shape: f32[128,128], index: 0, kind: input, shape index: {}]
  %s1 = inlined_call_operand.vmem [shape: f32[128,256], index: 1, kind: input, shape index: {}]
  %s2 = inlined_call_operand.vmem [shape: f32[256,8], index: 2, kind: input, shape index: {}]
  %s3 = inlined_call_operand.<no memory space> [shape: f32[1,1], index: 3, kind: input, shape index: {}]
  %s4 = inlined_call_operand.vmem [shape: f32[128,8], index: 4, kind: output, shape index: {}]
  %s5 = sld [smem:[#allocation0]]
  $region26: #{latent_predictor_x14.1} parent=0
    _
  %s7 = ssub.s32 1, %s5
  %s8 = scalar_select 0, %s7, %s5
  %v9 = vstv %s3
  %10 = vst [vmem:[#allocation2] sm:$0x1] %v9
  // Predicated region
  $region2: #{latent_predictor_x14.1} parent=0 // pred_check
    _
  $region3: #{latent_predictor_x14.1} parent=0 // pred_check_branch
    %12 = sbr.rel (0) target = $region5
  $region4: #{latent_predictor_x14.1} parent=0 // pred_region
    _
  $region5: #{latent_predictor_x14.1} parent=0 // pred_fallthru
    _
  // Predicated region
  $region6: #{latent_predictor_x14.1} parent=0 // pred_check
    _
  $region7: #{latent_predictor_x14.1} parent=0 // pred_check_branch
    %14 = sbr.rel (0) target = $region9
  $region8: #{latent_predictor_x14.1} parent=0 // pred_region
    _
  $region9: #{latent_predictor_x14.1} parent=0 // pred_fallthru
    _
  // Predicated region
  $region10: #{latent_predictor_x14.1} parent=0 // pred_check
    _
  $region11: #{latent_predictor_x14.1} parent=0 // pred_check_branch
    %16 = sbr.rel (0) target = $region13
  $region12: #{latent_predictor_x14.1} parent=0 // pred_region
    _
  $region13: #{latent_predictor_x14.1} parent=0 // pred_fallthru
    _
  // Predicated region
  $region14: #{latent_predictor_x14.1} parent=0 // pred_check
    _
  $region15: #{latent_predictor_x14.1} parent=0 // pred_check_branch
    %18 = sbr.rel (0) target = $region17
  $region16: #{latent_predictor_x14.1} parent=0 // pred_region
    _
  $region17: #{latent_predictor_x14.1} parent=0 // pred_fallthru
    _
  %v19 = vld [vmem:[%s0] sm:$0xff]
  %v20 = vld [vmem:[%s0 + $0x8] sm:$0xff]
  %v21 = vld [vmem:[%s0 + $0x10] sm:$0xff]
  %v22 = vld [vmem:[%s0 + $0x18] sm:$0xff]
  %v23 = vld [vmem:[%s0 + $0x20] sm:$0xff]
  %v24 = vld [vmem:[%s0 + $0x28] sm:$0xff]
  %v25 = vld [vmem:[%s0 + $0x30] sm:$0xff]
  %v26 = vld [vmem:[%s0 + $0x38] sm:$0xff]
  %v27 = vld [vmem:[%s0 + $0x40] sm:$0xff]
  %v28 = vld [vmem:[%s0 + $0x48] sm:$0xff]
  %v29 = vld [vmem:[%s0 + $0x50] sm:$0xff]
  %v30 = vld [vmem:[%s0 + $0x58] sm:$0xff]
  %v31 = vld [vmem:[%s0 + $0x60] sm:$0xff]
  %v32 = vld [vmem:[%s0 + $0x68] sm:$0xff]
  %v33 = vld [vmem:[%s0 + $0x70] sm:$0xff]
  %v34 = vld [vmem:[%s0 + $0x78] sm:$0xff]
  %v35 = vld [vmem:[%s1] sm:$0xff]
  %v36 = vld [vmem:[%s1 + $0x8] sm:$0xff]
  %v37 = vld [vmem:[%s1 + $0x10] sm:$0xff]
  %v38 = vld [vmem:[%s1 + $0x18] sm:$0xff]
  %v39 = vld [vmem:[%s1 + $0x20] sm:$0xff]
  %v40 = vld [vmem:[%s1 + $0x28] sm:$0xff]
  %v41 = vld [vmem:[%s1 + $0x30] sm:$0xff]
  %v42 = vld [vmem:[%s1 + $0x38] sm:$0xff]
  %v43 = vld [vmem:[%s1 + $0x40] sm:$0xff]
  %v44 = vld [vmem:[%s1 + $0x48] sm:$0xff]
  %v45 = vld [vmem:[%s1 + $0x50] sm:$0xff]
  %v46 = vld [vmem:[%s1 + $0x58] sm:$0xff]
  %v47 = vld [vmem:[%s1 + $0x60] sm:$0xff]
  %v48 = vld [vmem:[%s1 + $0x68] sm:$0xff]
  %v49 = vld [vmem:[%s1 + $0x70] sm:$0xff]
  %v50 = vld [vmem:[%s1 + $0x78] sm:$0xff]
  %v51 = vld [vmem:[%s1 + $0x80] sm:$0xff]
  %v52 = vld [vmem:[%s1 + $0x88] sm:$0xff]
  %v53 = vld [vmem:[%s1 + $0x90] sm:$0xff]
  %v54 = vld [vmem:[%s1 + $0x98] sm:$0xff]
  %v55 = vld [vmem:[%s1 + $0xa0] sm:$0xff]
  %v56 = vld [vmem:[%s1 + $0xa8] sm:$0xff]
  %v57 = vld [vmem:[%s1 + $0xb0] sm:$0xff]
  %v58 = vld [vmem:[%s1 + $0xb8] sm:$0xff]
  %v59 = vld [vmem:[%s1 + $0xc0] sm:$0xff]
  %v60 = vld [vmem:[%s1 + $0xc8] sm:$0xff]
  %v61 = vld [vmem:[%s1 + $0xd0] sm:$0xff]
  %v62 = vld [vmem:[%s1 + $0xd8] sm:$0xff]
  %v63 = vld [vmem:[%s1 + $0xe0] sm:$0xff]
  %v64 = vld [vmem:[%s1 + $0xe8] sm:$0xff]
  %v65 = vld [vmem:[%s1 + $0xf0] sm:$0xff]
  %v66 = vld [vmem:[%s1 + $0xf8] sm:$0xff]
  %67 = vmatprep.subr.mxu0 %v36
  %68 = vmatpush1.msra.mxu0 %v35
  %69 = vmatprep.subr.mxu0 %v38
  %70 = vmatpush1.msra.mxu0 %v37
  %71 = vmatprep.subr.mxu0 %v40
  %72 = vmatpush1.msra.mxu0 %v39
  %73 = vmatprep.subr.mxu0 %v42
  %74 = vmatpush1.msra.mxu0 %v41
  %75 = vmatprep.subr.mxu0 %v44
  %76 = vmatpush1.msra.mxu0 %v43
  %77 = vmatprep.subr.mxu0 %v46
  %78 = vmatpush1.msra.mxu0 %v45
  %79 = vmatprep.subr.mxu0 %v48
  %80 = vmatpush1.msra.mxu0 %v47
  %81 = vmatprep.subr.mxu0 %v50
  %82 = vmatpush1.msra.mxu0 %v49
  %83 = vmatprep.subr.mxu0 %v52
  %84 = vmatpush1.msra.mxu0 %v51
  %85 = vmatprep.subr.mxu0 %v54
  %86 = vmatpush1.msra.mxu0 %v53
  %87 = vmatprep.subr.mxu0 %v56
  %88 = vmatpush1.msra.mxu0 %v55
  %89 = vmatprep.subr.mxu0 %v58
  %90 = vmatpush1.msra.mxu0 %v57
  %91 = vmatprep.subr.mxu0 %v60
  %92 = vmatpush1.msra.mxu0 %v59
  %93 = vmatprep.subr.mxu0 %v62
  %94 = vmatpush1.msra.mxu0 %v61
  %95 = vmatprep.subr.mxu0 %v64
  %96 = vmatpush1.msra.mxu0 %v63
  %97 = vmatprep.subr.mxu0 %v66
  %98 = vmatpush1.msra.mxu0 %v65
  %99 = vmatprep.subr.mxu0 0.0
  %100 = vmatpush1.msra.mxu0 0.0
  %101 = vmatprep.subr.mxu0 0.0
  %102 = vmatpush1.msra.mxu0 0.0
  %103 = vmatprep.subr.mxu0 0.0
  %104 = vmatpush1.msra.mxu0 0.0
  %105 = vmatprep.subr.mxu0 0.0
  %106 = vmatpush1.msra.mxu0 0.0
  %107 = vmatprep.subr.mxu0 0.0
  %108 = vmatpush1.msra.mxu0 0.0
  %109 = vmatprep.subr.mxu0 0.0
  %110 = vmatpush1.msra.mxu0 0.0
  %111 = vmatprep.subr.mxu0 0.0
  %112 = vmatpush1.msra.mxu0 0.0
  %113 = vmatprep.subr.mxu0 0.0
  %114 = vmatpush1.msra.mxu0 0.0
  %115 = vmatprep.subr.mxu0 0.0
  %116 = vmatpush1.msra.mxu0 0.0
  %117 = vmatprep.subr.mxu0 0.0
  %118 = vmatpush1.msra.mxu0 0.0
  %119 = vmatprep.subr.mxu0 0.0
  %120 = vmatpush1.msra.mxu0 0.0
  %121 = vmatprep.subr.mxu0 0.0
  %122 = vmatpush1.msra.mxu0 0.0
  %123 = vmatprep.subr.mxu0 0.0
  %124 = vmatpush1.msra.mxu0 0.0
  %125 = vmatprep.subr.mxu0 0.0
  %126 = vmatpush1.msra.mxu0 0.0
  %127 = vmatprep.subr.mxu0 0.0
  %128 = vmatpush1.msra.mxu0 0.0
  %129 = vmatprep.subr.mxu0 0.0
  %130 = vmatpush1.msra.mxu0 0.0
  %131 = vmatprep.mubr.f32.mxu0 0.0
  %132 = vmatmul.mubr.f32.gmra.mrb[0].mxu0 %v19
  %v133 = vpop.f32.mrb[0].mxu0
  %v134 = vadd.f32 0.0, %v133
  %v135 = vpop.f32.mrb[0].mxu0
  %v136 = vadd.f32 0.0, %v135
  %137 = vmatprep.mubr.f32.mxu0 0.0
  %138 = vmatmul.mubr.f32.gmra.mrb[0].mxu0 %v20
  %v139 = vpop.f32.mrb[0].mxu0
  %v140 = vadd.f32 0.0, %v139
  %v141 = vpop.f32.mrb[0].mxu0
  %v142 = vadd.f32 0.0, %v141
  %143 = vmatprep.mubr.f32.mxu0 0.0
  %144 = vmatmul.mubr.f32.gmra.mrb[0].mxu0 %v21
  %v145 = vpop.f32.mrb[0].mxu0
  %v146 = vadd.f32 0.0, %v145
  %v147 = vpop.f32.mrb[0].mxu0
  %v148 = vadd.f32 0.0, %v147
  %149 = vmatprep.mubr.f32.mxu0 0.0
  %150 = vmatmul.mubr.f32.gmra.mrb[0].mxu0 %v22
  %v151 = vpop.f32.mrb[0].mxu0
  %v152 = vadd.f32 0.0, %v151
  %v153 = vpop.f32.mrb[0].mxu0
  %v154 = vadd.f32 0.0, %v153
  %155 = vmatprep.mubr.f32.mxu0 0.0
  %156 = vmatmul.mubr.f32.gmra.mrb[0].mxu0 %v23
  %v157 = vpop.f32.mrb[0].mxu0
  %v158 = vadd.f32 0.0, %v157
  %v159 = vpop.f32.mrb[0].mxu0
  %v160 = vadd.f32 0.0, %v159
  %161 = vmatprep.mubr.f32.mxu0 0.0
  %162 = vmatmul.mubr.f32.gmra.mrb[0].mxu0 %v24
  %v163 = vpop.f32.mrb[0].mxu0
  %v164 = vadd.f32 0.0, %v163
  %v165 = vpop.f32.mrb[0].mxu0
  %v166 = vadd.f32 0.0, %v165
  %167 = vmatprep.mubr.f32.mxu0 0.0
  %168 = vmatmul.mubr.f32.gmra.mrb[0].mxu0 %v25
  %v169 = vpop.f32.mrb[0].mxu0
  %v170 = vadd.f32 0.0, %v169
  %v171 = vpop.f32.mrb[0].mxu0
  %v172 = vadd.f32 0.0, %v171
  %173 = vmatprep.mubr.f32.mxu0 0.0
  %174 = vmatmul.mubr.f32.gmra.mrb[0].mxu0 %v26
  %v175 = vpop.f32.mrb[0].mxu0
  %v176 = vadd.f32 0.0, %v175
  %v177 = vpop.f32.mrb[0].mxu0
  %v178 = vadd.f32 0.0, %v177
  %179 = vmatprep.mubr.f32.mxu0 0.0
  %180 = vmatmul.mubr.f32.gmra.mrb[0].mxu0 %v27
  %v181 = vpop.f32.mrb[0].mxu0
  %v182 = vadd.f32 0.0, %v181
  %v183 = vpop.f32.mrb[0].mxu0
  %v184 = vadd.f32 0.0, %v183
  %185 = vmatprep.mubr.f32.mxu0 0.0
  %186 = vmatmul.mubr.f32.gmra.mrb[0].mxu0 %v28
  %v187 = vpop.f32.mrb[0].mxu0
  %v188 = vadd.f32 0.0, %v187
  %v189 = vpop.f32.mrb[0].mxu0
  %v190 = vadd.f32 0.0, %v189
  %191 = vmatprep.mubr.f32.mxu0 0.0
  %192 = vmatmul.mubr.f32.gmra.mrb[0].mxu0 %v29
  %v193 = vpop.f32.mrb[0].mxu0
  %v194 = vadd.f32 0.0, %v193
  %v195 = vpop.f32.mrb[0].mxu0
  %v196 = vadd.f32 0.0, %v195
  %197 = vmatprep.mubr.f32.mxu0 0.0
  %198 = vmatmul.mubr.f32.gmra.mrb[0].mxu0 %v30
  %v199 = vpop.f32.mrb[0].mxu0
  %v200 = vadd.f32 0.0, %v199
  %v201 = vpop.f32.mrb[0].mxu0
  %v202 = vadd.f32 0.0, %v201
  %203 = vmatprep.mubr.f32.mxu0 0.0
  %204 = vmatmul.mubr.f32.gmra.mrb[0].mxu0 %v31
  %v205 = vpop.f32.mrb[0].mxu0
  %v206 = vadd.f32 0.0, %v205
  %v207 = vpop.f32.mrb[0].mxu0
  %v208 = vadd.f32 0.0, %v207
  %209 = vmatprep.mubr.f32.mxu0 0.0
  %210 = vmatmul.mubr.f32.gmra.mrb[0].mxu0 %v32
  %v211 = vpop.f32.mrb[0].mxu0
  %v212 = vadd.f32 0.0, %v211
  %v213 = vpop.f32.mrb[0].mxu0
  %v214 = vadd.f32 0.0, %v213
  %215 = vmatprep.mubr.f32.mxu0 0.0
  %216 = vmatmul.mubr.f32.gmra.mrb[0].mxu0 %v33
  %v217 = vpop.f32.mrb[0].mxu0
  %v218 = vadd.f32 0.0, %v217
  %v219 = vpop.f32.mrb[0].mxu0
  %v220 = vadd.f32 0.0, %v219
  %221 = vmatprep.mubr.f32.mxu0 0.0
  %222 = vmatmul.mubr.f32.gmra.mrb[0].mxu0 %v34
  %v223 = vpop.f32.mrb[0].mxu0
  %v224 = vadd.f32 0.0, %v223
  %v225 = vpop.f32.mrb[0].mxu0
  %v226 = vadd.f32 0.0, %v225
  %227 = vdwg.mxu0
  %v228 = vmax.f32 %v134, 0.0
  %v229 = vmax.f32 %v136, 0.0
  %v230 = vmax.f32 %v140, 0.0
  %v231 = vmax.f32 %v142, 0.0
  %v232 = vmax.f32 %v146, 0.0
  %v233 = vmax.f32 %v148, 0.0
  %v234 = vmax.f32 %v152, 0.0
  %v235 = vmax.f32 %v154, 0.0
  %v236 = vmax.f32 %v158, 0.0
  %v237 = vmax.f32 %v160, 0.0
  %v238 = vmax.f32 %v164, 0.0
  %v239 = vmax.f32 %v166, 0.0
  %v240 = vmax.f32 %v170, 0.0
  %v241 = vmax.f32 %v172, 0.0
  %v242 = vmax.f32 %v176, 0.0
  %v243 = vmax.f32 %v178, 0.0
  %v244 = vmax.f32 %v182, 0.0
  %v245 = vmax.f32 %v184, 0.0
  %v246 = vmax.f32 %v188, 0.0
  %v247 = vmax.f32 %v190, 0.0
  %v248 = vmax.f32 %v194, 0.0
  %v249 = vmax.f32 %v196, 0.0
  %v250 = vmax.f32 %v200, 0.0
  %v251 = vmax.f32 %v202, 0.0
  %v252 = vmax.f32 %v206, 0.0
  %v253 = vmax.f32 %v208, 0.0
  %v254 = vmax.f32 %v212, 0.0
  %v255 = vmax.f32 %v214, 0.0
  %v256 = vmax.f32 %v218, 0.0
  %v257 = vmax.f32 %v220, 0.0
  %v258 = vmax.f32 %v224, 0.0
  %v259 = vmax.f32 %v226, 0.0
  %v260 = vld [vmem:[%s2] sm:$0xff]
  %v261 = vld [vmem:[%s2 + $0x8] sm:$0xff]
  %v262 = vld [vmem:[%s2 + $0x10] sm:$0xff]
  %v263 = vld [vmem:[%s2 + $0x18] sm:$0xff]
  %v264 = vld [vmem:[%s2 + $0x20] sm:$0xff]
  %v265 = vld [vmem:[%s2 + $0x28] sm:$0xff]
  %v266 = vld [vmem:[%s2 + $0x30] sm:$0xff]
  %v267 = vld [vmem:[%s2 + $0x38] sm:$0xff]
  %v268 = vld [vmem:[%s2 + $0x40] sm:$0xff]
  %v269 = vld [vmem:[%s2 + $0x48] sm:$0xff]
  %v270 = vld [vmem:[%s2 + $0x50] sm:$0xff]
  %v271 = vld [vmem:[%s2 + $0x58] sm:$0xff]
  %v272 = vld [vmem:[%s2 + $0x60] sm:$0xff]
  %v273 = vld [vmem:[%s2 + $0x68] sm:$0xff]
  %v274 = vld [vmem:[%s2 + $0x70] sm:$0xff]
  %v275 = vld [vmem:[%s2 + $0x78] sm:$0xff]
  %v276 = vld [vmem:[%s2 + $0x80] sm:$0xff]
  %v277 = vld [vmem:[%s2 + $0x88] sm:$0xff]
  %v278 = vld [vmem:[%s2 + $0x90] sm:$0xff]
  %v279 = vld [vmem:[%s2 + $0x98] sm:$0xff]
  %v280 = vld [vmem:[%s2 + $0xa0] sm:$0xff]
  %v281 = vld [vmem:[%s2 + $0xa8] sm:$0xff]
  %v282 = vld [vmem:[%s2 + $0xb0] sm:$0xff]
  %v283 = vld [vmem:[%s2 + $0xb8] sm:$0xff]
  %v284 = vld [vmem:[%s2 + $0xc0] sm:$0xff]
  %v285 = vld [vmem:[%s2 + $0xc8] sm:$0xff]
  %v286 = vld [vmem:[%s2 + $0xd0] sm:$0xff]
  %v287 = vld [vmem:[%s2 + $0xd8] sm:$0xff]
  %v288 = vld [vmem:[%s2 + $0xe0] sm:$0xff]
  %v289 = vld [vmem:[%s2 + $0xe8] sm:$0xff]
  %v290 = vld [vmem:[%s2 + $0xf0] sm:$0xff]
  %v291 = vld [vmem:[%s2 + $0xf8] sm:$0xff]
  %v292 = vld [vmem:[#allocation2] sm:$0x1]
  %v294 = vlaneseq
  %v295 = vshrl.u32 %v294, 7
  %v296 = vsub.s32 0, %v295
  %v297 = vrot.slane %v292, %v296
  %298 = vset.pattern.permute.xlu0 0
  %299 = vperm.xlu0 %298, %v297
  %v300 = vpop.permute.xlu0 %299
  %302 = vmatprep.subr.mxu0 0.0
  %303 = vmatpush1.msra.mxu0 %v260
  %304 = vmatprep.subr.mxu0 0.0
  %305 = vmatpush1.msra.mxu0 %v261
  %306 = vmatprep.subr.mxu0 0.0
  %307 = vmatpush1.msra.mxu0 %v262
  %308 = vmatprep.subr.mxu0 0.0
  %309 = vmatpush1.msra.mxu0 %v263
  %310 = vmatprep.subr.mxu0 0.0
  %311 = vmatpush1.msra.mxu0 %v264
  %312 = vmatprep.subr.mxu0 0.0
  %313 = vmatpush1.msra.mxu0 %v265
  %314 = vmatprep.subr.mxu0 0.0
  %315 = vmatpush1.msra.mxu0 %v266
  %316 = vmatprep.subr.mxu0 0.0
  %317 = vmatpush1.msra.mxu0 %v267
  %318 = vmatprep.subr.mxu0 0.0
  %319 = vmatpush1.msra.mxu0 %v268
  %320 = vmatprep.subr.mxu0 0.0
  %321 = vmatpush1.msra.mxu0 %v269
  %322 = vmatprep.subr.mxu0 0.0
  %323 = vmatpush1.msra.mxu0 %v270
  %324 = vmatprep.subr.mxu0 0.0
  %325 = vmatpush1.msra.mxu0 %v271
  %326 = vmatprep.subr.mxu0 0.0
  %327 = vmatpush1.msra.mxu0 %v272
  %328 = vmatprep.subr.mxu0 0.0
  %329 = vmatpush1.msra.mxu0 %v273
  %330 = vmatprep.subr.mxu0 0.0
  %331 = vmatpush1.msra.mxu0 %v274
  %332 = vmatprep.subr.mxu0 0.0
  %333 = vmatpush1.msra.mxu0 %v275
  %334 = vmatprep.subr.mxu0 0.0
  %335 = vmatpush1.msra.mxu0 %v276
  %336 = vmatprep.subr.mxu0 0.0
  %337 = vmatpush1.msra.mxu0 %v277
  %338 = vmatprep.subr.mxu0 0.0
  %339 = vmatpush1.msra.mxu0 %v278
  %340 = vmatprep.subr.mxu0 0.0
  %341 = vmatpush1.msra.mxu0 %v279
  %342 = vmatprep.subr.mxu0 0.0
  %343 = vmatpush1.msra.mxu0 %v280
  %344 = vmatprep.subr.mxu0 0.0
  %345 = vmatpush1.msra.mxu0 %v281
  %346 = vmatprep.subr.mxu0 0.0
  %347 = vmatpush1.msra.mxu0 %v282
  %348 = vmatprep.subr.mxu0 0.0
  %349 = vmatpush1.msra.mxu0 %v283
  %350 = vmatprep.subr.mxu0 0.0
  %351 = vmatpush1.msra.mxu0 %v284
  %352 = vmatprep.subr.mxu0 0.0
  %353 = vmatpush1.msra.mxu0 %v285
  %354 = vmatprep.subr.mxu0 0.0
  %355 = vmatpush1.msra.mxu0 %v286
  %356 = vmatprep.subr.mxu0 0.0
  %357 = vmatpush1.msra.mxu0 %v287
  %358 = vmatprep.subr.mxu0 0.0
  %359 = vmatpush1.msra.mxu0 %v288
  %360 = vmatprep.subr.mxu0 0.0
  %361 = vmatpush1.msra.mxu0 %v289
  %362 = vmatprep.subr.mxu0 0.0
  %363 = vmatpush1.msra.mxu0 %v290
  %364 = vmatprep.subr.mxu0 0.0
  %365 = vmatpush1.msra.mxu0 %v291
  %366 = vmatprep.mubr.f32.mxu0 %v229
  %367 = vmatmul.mubr.f32.gmra.mrb[0].mxu0 %v228
  %v368 = vpop.f32.mrb[0].mxu0
  %v369 = vadd.f32 %v300, %v368
  %v370 = vpop.f32.mrb[0].mxu0
  %371 = vmatprep.mubr.f32.mxu0 %v231
  %372 = vmatmul.mubr.f32.gmra.mrb[0].mxu0 %v230
  %v373 = vpop.f32.mrb[0].mxu0
  %v374 = vadd.f32 %v300, %v373
  %v375 = vpop.f32.mrb[0].mxu0
  %376 = vmatprep.mubr.f32.mxu0 %v233
  %377 = vmatmul.mubr.f32.gmra.mrb[0].mxu0 %v232
  %v378 = vpop.f32.mrb[0].mxu0
  %v379 = vadd.f32 %v300, %v378
  %v380 = vpop.f32.mrb[0].mxu0
  %381 = vmatprep.mubr.f32.mxu0 %v235
  %382 = vmatmul.mubr.f32.gmra.mrb[0].mxu0 %v234
  %v383 = vpop.f32.mrb[0].mxu0
  %v384 = vadd.f32 %v300, %v383
  %v385 = vpop.f32.mrb[0].mxu0
  %386 = vmatprep.mubr.f32.mxu0 %v237
  %387 = vmatmul.mubr.f32.gmra.mrb[0].mxu0 %v236
  %v388 = vpop.f32.mrb[0].mxu0
  %v389 = vadd.f32 %v300, %v388
  %v390 = vpop.f32.mrb[0].mxu0
  %391 = vmatprep.mubr.f32.mxu0 %v239
  %392 = vmatmul.mubr.f32.gmra.mrb[0].mxu0 %v238
  %v393 = vpop.f32.mrb[0].mxu0
  %v394 = vadd.f32 %v300, %v393
  %v395 = vpop.f32.mrb[0].mxu0
  %396 = vmatprep.mubr.f32.mxu0 %v241
  %397 = vmatmul.mubr.f32.gmra.mrb[0].mxu0 %v240
  %v398 = vpop.f32.mrb[0].mxu0
  %v399 = vadd.f32 %v300, %v398
  %v400 = vpop.f32.mrb[0].mxu0
  %401 = vmatprep.mubr.f32.mxu0 %v243
  %402 = vmatmul.mubr.f32.gmra.mrb[0].mxu0 %v242
  %v403 = vpop.f32.mrb[0].mxu0
  %v404 = vadd.f32 %v300, %v403
  %v405 = vpop.f32.mrb[0].mxu0
  %406 = vmatprep.mubr.f32.mxu0 %v245
  %407 = vmatmul.mubr.f32.gmra.mrb[0].mxu0 %v244
  %v408 = vpop.f32.mrb[0].mxu0
  %v409 = vadd.f32 %v300, %v408
  %v410 = vpop.f32.mrb[0].mxu0
  %411 = vmatprep.mubr.f32.mxu0 %v247
  %412 = vmatmul.mubr.f32.gmra.mrb[0].mxu0 %v246
  %v413 = vpop.f32.mrb[0].mxu0
  %v414 = vadd.f32 %v300, %v413
  %v415 = vpop.f32.mrb[0].mxu0
  %416 = vmatprep.mubr.f32.mxu0 %v249
  %417 = vmatmul.mubr.f32.gmra.mrb[0].mxu0 %v248
  %v418 = vpop.f32.mrb[0].mxu0
  %v419 = vadd.f32 %v300, %v418
  %v420 = vpop.f32.mrb[0].mxu0
  %421 = vmatprep.mubr.f32.mxu0 %v251
  %422 = vmatmul.mubr.f32.gmra.mrb[0].mxu0 %v250
  %v423 = vpop.f32.mrb[0].mxu0
  %v424 = vadd.f32 %v300, %v423
  %v425 = vpop.f32.mrb[0].mxu0
  %426 = vmatprep.mubr.f32.mxu0 %v253
  %427 = vmatmul.mubr.f32.gmra.mrb[0].mxu0 %v252
  %v428 = vpop.f32.mrb[0].mxu0
  %v429 = vadd.f32 %v300, %v428
  %v430 = vpop.f32.mrb[0].mxu0
  %431 = vmatprep.mubr.f32.mxu0 %v255
  %432 = vmatmul.mubr.f32.gmra.mrb[0].mxu0 %v254
  %v433 = vpop.f32.mrb[0].mxu0
  %v434 = vadd.f32 %v300, %v433
  %v435 = vpop.f32.mrb[0].mxu0
  %436 = vmatprep.mubr.f32.mxu0 %v257
  %437 = vmatmul.mubr.f32.gmra.mrb[0].mxu0 %v256
  %v438 = vpop.f32.mrb[0].mxu0
  %v439 = vadd.f32 %v300, %v438
  %v440 = vpop.f32.mrb[0].mxu0
  %441 = vmatprep.mubr.f32.mxu0 %v259
  %442 = vmatmul.mubr.f32.gmra.mrb[0].mxu0 %v258
  %v443 = vpop.f32.mrb[0].mxu0
  %v444 = vadd.f32 %v300, %v443
  %v445 = vpop.f32.mrb[0].mxu0
  %446 = vdwg.mxu0
  %vm447 = vcmask 64512
  %448 = vst.msk [vmem:[%s4] sm:$0xff] %vm447, %v369
  %449 = vst.msk [vmem:[%s4 + $0x8] sm:$0xff] %vm447, %v374
  %450 = vst.msk [vmem:[%s4 + $0x10] sm:$0xff] %vm447, %v379
  %451 = vst.msk [vmem:[%s4 + $0x18] sm:$0xff] %vm447, %v384
  %452 = vst.msk [vmem:[%s4 + $0x20] sm:$0xff] %vm447, %v389
  %453 = vst.msk [vmem:[%s4 + $0x28] sm:$0xff] %vm447, %v394
  %454 = vst.msk [vmem:[%s4 + $0x30] sm:$0xff] %vm447, %v399
  %455 = vst.msk [vmem:[%s4 + $0x38] sm:$0xff] %vm447, %v404
  %456 = vst.msk [vmem:[%s4 + $0x40] sm:$0xff] %vm447, %v409
  %457 = vst.msk [vmem:[%s4 + $0x48] sm:$0xff] %vm447, %v414
  %458 = vst.msk [vmem:[%s4 + $0x50] sm:$0xff] %vm447, %v419
  %459 = vst.msk [vmem:[%s4 + $0x58] sm:$0xff] %vm447, %v424
  %460 = vst.msk [vmem:[%s4 + $0x60] sm:$0xff] %vm447, %v429
  %461 = vst.msk [vmem:[%s4 + $0x68] sm:$0xff] %vm447, %v434
  %462 = vst.msk [vmem:[%s4 + $0x70] sm:$0xff] %vm447, %v439
  %463 = vst.msk [vmem:[%s4 + $0x78] sm:$0xff] %vm447, %v444
  // Predicated region
  $region18: #{latent_predictor_x14.1} parent=0 // pred_check
    _
  $region19: #{latent_predictor_x14.1} parent=0 // pred_check_branch
    %465 = sbr.rel (0) target = $region21
  $region20: #{latent_predictor_x14.1} parent=0 // pred_region
    _
  $region21: #{latent_predictor_x14.1} parent=0 // pred_fallthru
    _
  // Predicated region
  $region22: #{latent_predictor_x14.1} parent=0 // pred_check
    _
  $region23: #{latent_predictor_x14.1} parent=0 // pred_check_branch
    %467 = sbr.rel (0) target = $region25
  $region24: #{latent_predictor_x14.1} parent=0 // pred_region
    _
  $region25: #{latent_predictor_x14.1} parent=0 // pred_fallthru
    _

</llo_original>
